<compile_context>
chip_gen: v7x
topology: tpu7x:2x2x1
jax: 0.10.0
libtpu: 0.0.40
codegen_flags: <defaults>
</compile_context>

<pallas_src>
import jax
import jax.numpy as jnp
from jax.experimental import pallas as pl
from jax.experimental.pallas import tpu as pltpu

LANE = 128  # TPU lane width


def _round_up(n, m):
    return ((n + m - 1) // m) * m


def mlp_kernel(x_ref, w1_ref, b1_ref, w2_ref, b2_ref, w3_ref, b3_ref, o_ref):
    # One batch tile, everything in VMEM. Weights are bf16, accumulation f32.
    x = x_ref[...].astype(jnp.bfloat16)
    h1 = jnp.dot(x, w1_ref[...], preferred_element_type=jnp.float32) + b1_ref[...]
    h1 = jnp.maximum(h1, 0.0).astype(jnp.bfloat16)
    h2 = jnp.dot(h1, w2_ref[...], preferred_element_type=jnp.float32) + b2_ref[...]
    h2 = jnp.maximum(h2, 0.0).astype(jnp.bfloat16)
    o_ref[...] = (
        jnp.dot(h2, w3_ref[...], preferred_element_type=jnp.float32) + b3_ref[...]
    )


def mlp_forward(x, padded_params, num_outputs, *, tile_b=256):
    """x: [B, num_inputs] f32. padded_params: output of pad_params()."""
    w1, b1 = padded_params["w1"], padded_params["b1"]
    w2, b2 = padded_params["w2"], padded_params["b2"]
    w3, b3 = padded_params["w3"], padded_params["b3"]

    B, num_inputs = x.shape
    out_pad = w3.shape[1]  # num_outputs rounded up to 128 -> lane-dense store

    # Batch tile: multiple of 8 (sublane), capped at tile_b. Pad B so the grid
    # divides evenly (padded rows are sliced off below).
    tb = min(tile_b, _round_up(B, 8))
    b_pad = _round_up(B, tb)
    if b_pad != B:
        x = jnp.pad(x, ((0, b_pad - B), (0, 0)))

    def resident(shape):
        # Same block every grid step -> stays in VMEM for the whole launch.
        return pl.BlockSpec(shape, lambda i: tuple(0 for _ in shape))

    out = pl.pallas_call(
        mlp_kernel,
        out_shape=jax.ShapeDtypeStruct((b_pad, out_pad), jnp.float32),
        grid=(b_pad // tb,),
        in_specs=[
            pl.BlockSpec((tb, num_inputs), lambda i: (i, 0)),  # x: tiled over batch
            resident(w1.shape), resident(b1.shape),
            resident(w2.shape), resident(b2.shape),
            resident(w3.shape), resident(b3.shape),
        ],
        out_specs=pl.BlockSpec((tb, out_pad), lambda i: (i, 0)),
        compiler_params=pltpu.CompilerParams(
            dimension_semantics=("parallel",),  # data-parallel batch axis
        ),
    )(x, w1, b1, w2, b2, w3, b3)

    return out[:B, :num_outputs]


def init_params(key, num_inputs, num_outputs):
    """Mimics torch.nn.Linear default init (uniform +/- 1/sqrt(fan_in)).

    Weights stored as [in, out] (transpose of PyTorch's [out, in]); biases (1, out).
    """
    dims = [(num_inputs, 30), (30, 20), (20, num_outputs)]
    params = {}
    for idx, (fan_in, fan_out) in enumerate(dims, start=1):
        key, kw, kb = jax.random.split(key, 3)
        bound = 1.0 / jnp.sqrt(jnp.float32(fan_in))
        params[f"w{idx}"] = jax.random.uniform(
            kw, (fan_in, fan_out), jnp.float32, minval=-bound, maxval=bound
        )
        params[f"b{idx}"] = jax.random.uniform(
            kb, (1, fan_out), jnp.float32, minval=-bound, maxval=bound
        )
    return params


def pad_params(params):
    """Zero-pad hidden/output feature dims to multiples of 128 and cast weights
    to bf16 (done once). Padded hidden units compute relu(0) = 0 and contribute
    nothing downstream, so the math is unchanged."""
    num_inputs = params["w1"].shape[0]
    widths = [params["w1"].shape[1], params["w2"].shape[1], params["w3"].shape[1]]
    padded = [_round_up(w, LANE) for w in widths]
    in_dims = [num_inputs, padded[0], padded[1]]

    out = {}
    for idx in range(1, 4):
        w = params[f"w{idx}"]
        b = params[f"b{idx}"]
        wi = jnp.zeros((in_dims[idx - 1], padded[idx - 1]), jnp.float32)
        wi = wi.at[: w.shape[0], : w.shape[1]].set(w)
        bi = jnp.zeros((1, padded[idx - 1]), jnp.float32)
        bi = bi.at[:, : b.shape[1]].set(b)
        out[f"w{idx}"] = wi.astype(jnp.bfloat16)  # MXU-native weights
        out[f"b{idx}"] = bi                        # biases stay f32 (VMEM, not SMEM)
    return out


if __name__ == "__main__":
    num_inputs, num_outputs = 16, 4
    batch = 1024  # enough rows that the batch grid actually pipelines: grid=(4,)

    key = jax.random.PRNGKey(0)
    key, kx = jax.random.split(key)
    x = jax.random.normal(kx, (batch, num_inputs), jnp.float32)
    params = init_params(key, num_inputs, num_outputs)
    pparams = pad_params(params)

    out = mlp_forward(x, pparams, num_outputs)
    jax.block_until_ready(out)
    assert out.shape == (batch, num_outputs)

    # Reference 1: same math / same bf16-weight, f32-accumulation path in plain JAX.
    xb = x.astype(jnp.bfloat16)
    h = jnp.maximum(
        jnp.dot(xb, params["w1"].astype(jnp.bfloat16),
                preferred_element_type=jnp.float32) + params["b1"], 0.0)
    h = jnp.maximum(
        jnp.dot(h.astype(jnp.bfloat16), params["w2"].astype(jnp.bfloat16),
                preferred_element_type=jnp.float32) + params["b2"], 0.0)
    ref = (jnp.dot(h.astype(jnp.bfloat16), params["w3"].astype(jnp.bfloat16),
                   preferred_element_type=jnp.float32) + params["b3"])
    assert jnp.allclose(out, ref, atol=1e-2, rtol=1e-2), float(
        jnp.max(jnp.abs(out - ref)))

    # Reference 2: full f32 math (looser tolerance due to bf16 weights/activations).
    hf = jnp.maximum(x @ params["w1"] + params["b1"], 0.0)
    hf = jnp.maximum(hf @ params["w2"] + params["b2"], 0.0)
    reff = hf @ params["w3"] + params["b3"]
    assert jnp.allclose(out, reff, atol=5e-2, rtol=5e-2), float(
        jnp.max(jnp.abs(out - reff)))

    print("KERNEL_OK")
</pallas_src>

<mosaic_0001>
module attributes {stable_mosaic.version = 11 : i64} {
  func.func @mlp_kernel(%arg0: i32, %arg1: memref<256x16xf32, #tpu.memory_space<vmem>>, %arg2: memref<16x128xbf16, #tpu.memory_space<vmem>>, %arg3: memref<1x128xf32, #tpu.memory_space<vmem>>, %arg4: memref<128x128xbf16, #tpu.memory_space<vmem>>, %arg5: memref<1x128xf32, #tpu.memory_space<vmem>>, %arg6: memref<128x128xbf16, #tpu.memory_space<vmem>>, %arg7: memref<1x128xf32, #tpu.memory_space<vmem>>, %arg8: memref<256x128xf32, #tpu.memory_space<vmem>>) attributes {dimension_semantics = [#tpu.dimension_semantics<parallel>], iteration_bounds = array<i64: 4>, scalar_prefetch = 0 : i64, scratch_operands = 0 : i64, tpu.core_type = #tpu.core_type<tc>, window_params = [{transform_indices = @transform_0, window_bounds = array<i64: 256, 16>}, {pipeline_mode = #tpu.pipeline_mode<synchronous>, transform_indices = @transform_1, window_bounds = array<i64: 16, 128>}, {pipeline_mode = #tpu.pipeline_mode<synchronous>, transform_indices = @transform_2, window_bounds = array<i64: 1, 128>}, {pipeline_mode = #tpu.pipeline_mode<synchronous>, transform_indices = @transform_3, window_bounds = array<i64: 128, 128>}, {pipeline_mode = #tpu.pipeline_mode<synchronous>, transform_indices = @transform_4, window_bounds = array<i64: 1, 128>}, {pipeline_mode = #tpu.pipeline_mode<synchronous>, transform_indices = @transform_5, window_bounds = array<i64: 128, 128>}, {pipeline_mode = #tpu.pipeline_mode<synchronous>, transform_indices = @transform_6, window_bounds = array<i64: 1, 128>}, {transform_indices = @transform_7, window_bounds = array<i64: 256, 128>}]} {
    %c0 = arith.constant 0 : index
    %c0_0 = arith.constant 0 : index
    %0 = vector.load %arg1[%c0, %c0_0] : memref<256x16xf32, #tpu.memory_space<vmem>>, vector<256x16xf32>
    %1 = arith.truncf %0 : vector<256x16xf32> to vector<256x16xbf16>
    %c0_1 = arith.constant 0 : index
    %c0_2 = arith.constant 0 : index
    %2 = vector.load %arg2[%c0_1, %c0_2] : memref<16x128xbf16, #tpu.memory_space<vmem>>, vector<16x128xbf16>
    %cst = arith.constant dense<0.000000e+00> : vector<256x128xf32>
    %3 = tpu.matmul %1, %2, %cst {dimension_numbers = #tpu.dot_dimension_numbers<[1], [0], [0], [1], [0, 0, 1, 1], [], []>} : vector<256x16xbf16>, vector<16x128xbf16>, vector<256x128xf32> -> vector<256x128xf32>
    %c0_3 = arith.constant 0 : index
    %c0_4 = arith.constant 0 : index
    %4 = vector.load %arg3[%c0_3, %c0_4] : memref<1x128xf32, #tpu.memory_space<vmem>>, vector<1x128xf32>
    %5 = vector.broadcast %4 : vector<1x128xf32> to vector<256x128xf32>
    %6 = arith.addf %3, %5 : vector<256x128xf32>
    %cst_5 = arith.constant 0.000000e+00 : f32
    %7 = vector.broadcast %cst_5 : f32 to vector<256x128xf32>
    %8 = arith.maximumf %6, %7 : vector<256x128xf32>
    %9 = arith.truncf %8 : vector<256x128xf32> to vector<256x128xbf16>
    %c0_6 = arith.constant 0 : index
    %c0_7 = arith.constant 0 : index
    %10 = vector.load %arg4[%c0_6, %c0_7] : memref<128x128xbf16, #tpu.memory_space<vmem>>, vector<128x128xbf16>
    %cst_8 = arith.constant dense<0.000000e+00> : vector<256x128xf32>
    %11 = tpu.matmul %9, %10, %cst_8 {dimension_numbers = #tpu.dot_dimension_numbers<[1], [0], [0], [1], [0, 0, 1, 1], [], []>} : vector<256x128xbf16>, vector<128x128xbf16>, vector<256x128xf32> -> vector<256x128xf32>
    %c0_9 = arith.constant 0 : index
    %c0_10 = arith.constant 0 : index
    %12 = vector.load %arg5[%c0_9, %c0_10] : memref<1x128xf32, #tpu.memory_space<vmem>>, vector<1x128xf32>
    %13 = vector.broadcast %12 : vector<1x128xf32> to vector<256x128xf32>
    %14 = arith.addf %11, %13 : vector<256x128xf32>
    %cst_11 = arith.constant 0.000000e+00 : f32
    %15 = vector.broadcast %cst_11 : f32 to vector<256x128xf32>
    %16 = arith.maximumf %14, %15 : vector<256x128xf32>
    %17 = arith.truncf %16 : vector<256x128xf32> to vector<256x128xbf16>
    %c0_12 = arith.constant 0 : index
    %c0_13 = arith.constant 0 : index
    %18 = vector.load %arg6[%c0_12, %c0_13] : memref<128x128xbf16, #tpu.memory_space<vmem>>, vector<128x128xbf16>
    %cst_14 = arith.constant dense<0.000000e+00> : vector<256x128xf32>
    %19 = tpu.matmul %17, %18, %cst_14 {dimension_numbers = #tpu.dot_dimension_numbers<[1], [0], [0], [1], [0, 0, 1, 1], [], []>} : vector<256x128xbf16>, vector<128x128xbf16>, vector<256x128xf32> -> vector<256x128xf32>
    %c0_15 = arith.constant 0 : index
    %c0_16 = arith.constant 0 : index
    %20 = vector.load %arg7[%c0_15, %c0_16] : memref<1x128xf32, #tpu.memory_space<vmem>>, vector<1x128xf32>
    %21 = vector.broadcast %20 : vector<1x128xf32> to vector<256x128xf32>
    %22 = arith.addf %19, %21 : vector<256x128xf32>
    %c0_17 = arith.constant 0 : index
    %c0_18 = arith.constant 0 : index
    %23 = vector.load %arg8[%c0_17, %c0_18] : memref<256x128xf32, #tpu.memory_space<vmem>>, vector<256x128xf32>
    tpu.vector_store %arg8[%c0_17, %c0_18], %22 {strides = array<i32>} : memref<256x128xf32, #tpu.memory_space<vmem>>, vector<256x128xf32>,
    return
  }
  func.func @transform_0(%arg0: i32) -> (i32, i32) {
    %c0_i32 = arith.constant 0 : i32
    %c0_i32_0 = arith.constant 0 : i32
    return %arg0, %c0_i32 : i32, i32
  }
  func.func @transform_1(%arg0: i32) -> (i32, i32) {
    %c0_i32 = arith.constant 0 : i32
    %c0_i32_0 = arith.constant 0 : i32
    %c0_i32_1 = arith.constant 0 : i32
    return %c0_i32, %c0_i32_0 : i32, i32
  }
  func.func @transform_2(%arg0: i32) -> (i32, i32) {
    %c0_i32 = arith.constant 0 : i32
    %c0_i32_0 = arith.constant 0 : i32
    %c0_i32_1 = arith.constant 0 : i32
    return %c0_i32, %c0_i32_0 : i32, i32
  }
  func.func @transform_3(%arg0: i32) -> (i32, i32) {
    %c0_i32 = arith.constant 0 : i32
    %c0_i32_0 = arith.constant 0 : i32
    %c0_i32_1 = arith.constant 0 : i32
    return %c0_i32, %c0_i32_0 : i32, i32
  }
  func.func @transform_4(%arg0: i32) -> (i32, i32) {
    %c0_i32 = arith.constant 0 : i32
    %c0_i32_0 = arith.constant 0 : i32
    %c0_i32_1 = arith.constant 0 : i32
    return %c0_i32, %c0_i32_0 : i32, i32
  }
  func.func @transform_5(%arg0: i32) -> (i32, i32) {
    %c0_i32 = arith.constant 0 : i32
    %c0_i32_0 = arith.constant 0 : i32
    %c0_i32_1 = arith.constant 0 : i32
    return %c0_i32, %c0_i32_0 : i32, i32
  }
  func.func @transform_6(%arg0: i32) -> (i32, i32) {
    %c0_i32 = arith.constant 0 : i32
    %c0_i32_0 = arith.constant 0 : i32
    %c0_i32_1 = arith.constant 0 : i32
    return %c0_i32, %c0_i32_0 : i32, i32
  }
  func.func @transform_7(%arg0: i32) -> (i32, i32) {
    %c0_i32 = arith.constant 0 : i32
    %c0_i32_0 = arith.constant 0 : i32
    return %arg0, %c0_i32 : i32, i32
  }
}

</mosaic_0001>

<llo_original>
// kernel: tpu_custom_call.1
$region0: #{tpu_custom_call.1}
  #allocation0 [shape = 'u32[]', space=smem, size = 0x4, offset = 0x4, fixed_abs, tag = 'smem constant byte address 0x4 - core index']
  #allocation1 [shape = 'u32[144,128]{1,0:T(1,128)}', space=vmem, size = 0x12000, scoped, tag = 'internal scratch']
  %s0 = inlined_call_operand.vmem [shape: f32[1024,16], index: 0, kind: input, shape index: {}]
  %s1 = inlined_call_operand.vmem [shape: bf16[16,128], index: 1, kind: input, shape index: {}]
  %s2 = inlined_call_operand.vmem [shape: f32[1,128], index: 2, kind: input, shape index: {}]
  %s3 = inlined_call_operand.vmem [shape: bf16[128,128], index: 3, kind: input, shape index: {}]
  %s4 = inlined_call_operand.vmem [shape: f32[1,128], index: 4, kind: input, shape index: {}]
  %s5 = inlined_call_operand.vmem [shape: bf16[128,128], index: 5, kind: input, shape index: {}]
  %s6 = inlined_call_operand.vmem [shape: f32[1,128], index: 6, kind: input, shape index: {}]
  %s7 = inlined_call_operand.hbm [shape: f32[1024,128], index: 7, kind: output, shape index: {}]
  %s8 = sld [smem:[#allocation0]]
  $region61: #{tpu_custom_call.1} parent=0
    _
  %s10 = ssub.s32 1, %s8
  %s11 = scalar_select 0, %s10, %s8
  $region1: #{tpu_custom_call.1} parent=0
    #allocation2 [shape = 'u8[262144]{0}', space=vmem, size = 0x40000, scoped, tag = 'output window, operand 0']
    #allocation3 [shape = 's32[2]{0}', space=sflag, size = 0x8, scoped, tag = 'scoped memory for tpu_custom_call.1']
    %12 = vsyncpa [#allocation3], 0
    %s13 = scalar_lea.sflag [#allocation3], 1
    %14 = vsyncpa %s13, 0
    loop: start=0, step=1, limit=6
    $region2: #{tpu_custom_call.1} parent=1 // loop_pre_header
      _
    $region3: #{tpu_custom_call.1} parent=1 // loop_header
      %s16 = sphi 0, %s20
      %p17 = scmp.ge.s32.totalorder %s16, 6
      %s26 = sphi 0, %s28
      %s29 = sphi 0, %s26
      %s30 = sphi 0, %s29
      %s46 = sphi 0, %s30
      %s50 = sphi 0, %s50
      %s52 = sphi 0, %s50
      %s53 = sphi 0, %s52
      %s67 = sphi 0, %s53
      %s71 = sphi 0, %s71
      %s73 = sphi 0, %s71
      %s74 = sphi 0, %s73
      %s88 = sphi 0, %s74
      %s92 = sphi 0, %s92
      %s94 = sphi 0, %s92
      %s95 = sphi 0, %s94
      %s109 = sphi 0, %s95
      %s113 = sphi 0, %s113
      %s115 = sphi 0, %s113
      %s116 = sphi 0, %s115
      %s130 = sphi 0, %s116
      %s134 = sphi 0, %s134
      %s136 = sphi 0, %s134
      %s137 = sphi 0, %s136
      %s151 = sphi 0, %s137
      %s155 = sphi 0, %s155
      %s157 = sphi 0, %s155
      %s158 = sphi 0, %s157
      %s172 = sphi 0, %s158
      %s178 = sphi 0, %s180
      %s181 = sphi 0, %s178
      %s182 = sphi 0, %s181
      %s198 = sphi 0, %s182
    $region4: #{tpu_custom_call.1} parent=1 // loop_header_branch
      %19 = sbr.rel (%p17) target = $region8
    $region5: #{tpu_custom_call.1} parent=1 // loop_body
      %s21 = ssub.s32 %s16, 1
      %s22 = ssub.s32 %s16, 2
      %s23 = sadd.s32 %s16, 1
      %s24 = ssub.s32 %s16, %s23
      %p25 = scmp.eq.s32.totalorder %s24, 0
      %s27 = sadd.s32 %s26, 1
      %s28 = scalar_select %p25, %s26, %s27
      %p31 = pneg %p25
      %p32 = scmp.eq.s32.totalorder %s16, 3
      %p33 = por %p31, %p32
      %p34 = scmp.ne.s32.totalorder %s26, %s29
      %p35 = scmp.eq.s32.totalorder %s16, 0
      %p36 = por %p34, %p35
      %p37 = scmp.ne.s32.totalorder %s26, %s29
      %p38 = scmp.eq.s32.totalorder %s21, 3
      %p39 = por %p37, %p38
      %p40 = scmp.ne.s32.totalorder %s29, %s30
      %p41 = scmp.eq.s32.totalorder %s21, 0
      %p42 = por %p40, %p41
      %p43 = scmp.ne.s32.totalorder %s29, %s30
      %p44 = scmp.eq.s32.totalorder %s22, 3
      %p45 = por %p43, %p44
      %p47 = scmp.ne.s32.totalorder %s30, %s46
      %p48 = scmp.eq.s32.totalorder %s22, 0
      %p49 = por %p47, %p48
      %s51 = sadd.s32 %s50, 1
      %p54 = scmp.eq.s32.totalorder %s16, 3
      %p55 = scmp.ne.s32.totalorder %s50, %s52
      %p56 = scmp.eq.s32.totalorder %s16, 0
      %p57 = por %p55, %p56
      %p58 = scmp.ne.s32.totalorder %s50, %s52
      %p59 = scmp.eq.s32.totalorder %s21, 3
      %p60 = por %p58, %p59
      %p61 = scmp.ne.s32.totalorder %s52, %s53
      %p62 = scmp.eq.s32.totalorder %s21, 0
      %p63 = por %p61, %p62
      %p64 = scmp.ne.s32.totalorder %s52, %s53
      %p65 = scmp.eq.s32.totalorder %s22, 3
      %p66 = por %p64, %p65
      %p68 = scmp.ne.s32.totalorder %s53, %s67
      %p69 = scmp.eq.s32.totalorder %s22, 0
      %p70 = por %p68, %p69
      %s72 = sadd.s32 %s71, 1
      %p75 = scmp.eq.s32.totalorder %s16, 3
      %p76 = scmp.ne.s32.totalorder %s71, %s73
      %p77 = scmp.eq.s32.totalorder %s16, 0
      %p78 = por %p76, %p77
      %p79 = scmp.ne.s32.totalorder %s71, %s73
      %p80 = scmp.eq.s32.totalorder %s21, 3
      %p81 = por %p79, %p80
      %p82 = scmp.ne.s32.totalorder %s73, %s74
      %p83 = scmp.eq.s32.totalorder %s21, 0
      %p84 = por %p82, %p83
      %p85 = scmp.ne.s32.totalorder %s73, %s74
      %p86 = scmp.eq.s32.totalorder %s22, 3
      %p87 = por %p85, %p86
      %p89 = scmp.ne.s32.totalorder %s74, %s88
      %p90 = scmp.eq.s32.totalorder %s22, 0
      %p91 = por %p89, %p90
      %s93 = sadd.s32 %s92, 1
      %p96 = scmp.eq.s32.totalorder %s16, 3
      %p97 = scmp.ne.s32.totalorder %s92, %s94
      %p98 = scmp.eq.s32.totalorder %s16, 0
      %p99 = por %p97, %p98
      %p100 = scmp.ne.s32.totalorder %s92, %s94
      %p101 = scmp.eq.s32.totalorder %s21, 3
      %p102 = por %p100, %p101
      %p103 = scmp.ne.s32.totalorder %s94, %s95
      %p104 = scmp.eq.s32.totalorder %s21, 0
      %p105 = por %p103, %p104
      %p106 = scmp.ne.s32.totalorder %s94, %s95
      %p107 = scmp.eq.s32.totalorder %s22, 3
      %p108 = por %p106, %p107
      %p110 = scmp.ne.s32.totalorder %s95, %s109
      %p111 = scmp.eq.s32.totalorder %s22, 0
      %p112 = por %p110, %p111
      %s114 = sadd.s32 %s113, 1
      %p117 = scmp.eq.s32.totalorder %s16, 3
      %p118 = scmp.ne.s32.totalorder %s113, %s115
      %p119 = scmp.eq.s32.totalorder %s16, 0
      %p120 = por %p118, %p119
      %p121 = scmp.ne.s32.totalorder %s113, %s115
      %p122 = scmp.eq.s32.totalorder %s21, 3
      %p123 = por %p121, %p122
      %p124 = scmp.ne.s32.totalorder %s115, %s116
      %p125 = scmp.eq.s32.totalorder %s21, 0
      %p126 = por %p124, %p125
      %p127 = scmp.ne.s32.totalorder %s115, %s116
      %p128 = scmp.eq.s32.totalorder %s22, 3
      %p129 = por %p127, %p128
      %p131 = scmp.ne.s32.totalorder %s116, %s130
      %p132 = scmp.eq.s32.totalorder %s22, 0
      %p133 = por %p131, %p132
      %s135 = sadd.s32 %s134, 1
      %p138 = scmp.eq.s32.totalorder %s16, 3
      %p139 = scmp.ne.s32.totalorder %s134, %s136
      %p140 = scmp.eq.s32.totalorder %s16, 0
      %p141 = por %p139, %p140
      %p142 = scmp.ne.s32.totalorder %s134, %s136
      %p143 = scmp.eq.s32.totalorder %s21, 3
      %p144 = por %p142, %p143
      %p145 = scmp.ne.s32.totalorder %s136, %s137
      %p146 = scmp.eq.s32.totalorder %s21, 0
      %p147 = por %p145, %p146
      %p148 = scmp.ne.s32.totalorder %s136, %s137
      %p149 = scmp.eq.s32.totalorder %s22, 3
      %p150 = por %p148, %p149
      %p152 = scmp.ne.s32.totalorder %s137, %s151
      %p153 = scmp.eq.s32.totalorder %s22, 0
      %p154 = por %p152, %p153
      %s156 = sadd.s32 %s155, 1
      %p159 = scmp.eq.s32.totalorder %s16, 3
      %p160 = scmp.ne.s32.totalorder %s155, %s157
      %p161 = scmp.eq.s32.totalorder %s16, 0
      %p162 = por %p160, %p161
      %p163 = scmp.ne.s32.totalorder %s155, %s157
      %p164 = scmp.eq.s32.totalorder %s21, 3
      %p165 = por %p163, %p164
      %p166 = scmp.ne.s32.totalorder %s157, %s158
      %p167 = scmp.eq.s32.totalorder %s21, 0
      %p168 = por %p166, %p167
      %p169 = scmp.ne.s32.totalorder %s157, %s158
      %p170 = scmp.eq.s32.totalorder %s22, 3
      %p171 = por %p169, %p170
      %p173 = scmp.ne.s32.totalorder %s158, %s172
      %p174 = scmp.eq.s32.totalorder %s22, 0
      %p175 = por %p173, %p174
      %s176 = ssub.s32 %s16, %s23
      %p177 = scmp.eq.s32.totalorder %s176, 0
      %s179 = sadd.s32 %s178, 1
      %s180 = scalar_select %p177, %s178, %s179
      %p183 = pneg %p177
      %p184 = scmp.eq.s32.totalorder %s16, 3
      %p185 = por %p183, %p184
      %p186 = scmp.ne.s32.totalorder %s178, %s181
      %p187 = scmp.eq.s32.totalorder %s16, 0
      %p188 = por %p186, %p187
      %p189 = scmp.ne.s32.totalorder %s178, %s181
      %p190 = scmp.eq.s32.totalorder %s21, 3
      %p191 = por %p189, %p190
      %p192 = scmp.ne.s32.totalorder %s181, %s182
      %p193 = scmp.eq.s32.totalorder %s21, 0
      %p194 = por %p192, %p193
      %p195 = scmp.ne.s32.totalorder %s181, %s182
      %p196 = scmp.eq.s32.totalorder %s22, 3
      %p197 = por %p195, %p196
      %p199 = scmp.ne.s32.totalorder %s182, %s198
      %p200 = scmp.eq.s32.totalorder %s22, 0
      %p201 = por %p199, %p200
      %p202 = scmp.le.s32.totalorder 1, %s16
      %p203 = scmp.lt.s32.totalorder %s16, 5
      %p204 = pnand %p202, %p203
      %p205 = pneg %p204
      // Predicated region
      $region9: #{tpu_custom_call.1} parent=5 // pred_check
        _
      $region10: #{tpu_custom_call.1} parent=5 // pred_check_branch
        %207 = sbr.rel (%p204) target = $region12
      $region11: #{tpu_custom_call.1} parent=5 // pred_region
        %s208 = ssub.s32 %s16, 1
        // Predicated region
        $region13: #{tpu_custom_call.1} parent=11 // pred_check
          %p209 = pneg %p63
        $region14: #{tpu_custom_call.1} parent=11 // pred_check_branch
          %211 = sbr.rel (%p209) target = $region16
        $region15: #{tpu_custom_call.1} parent=11 // pred_region
          _
        $region16: #{tpu_custom_call.1} parent=11 // pred_fallthru
          _
        // Predicated region
        $region17: #{tpu_custom_call.1} parent=11 // pred_check
          %p212 = pneg %p84
        $region18: #{tpu_custom_call.1} parent=11 // pred_check_branch
          %214 = sbr.rel (%p212) target = $region20
        $region19: #{tpu_custom_call.1} parent=11 // pred_region
          _
        $region20: #{tpu_custom_call.1} parent=11 // pred_fallthru
          _
        // Predicated region
        $region21: #{tpu_custom_call.1} parent=11 // pred_check
          %p215 = pneg %p105
        $region22: #{tpu_custom_call.1} parent=11 // pred_check_branch
          %217 = sbr.rel (%p215) target = $region24
        $region23: #{tpu_custom_call.1} parent=11 // pred_region
          _
        $region24: #{tpu_custom_call.1} parent=11 // pred_fallthru
          _
        // Predicated region
        $region25: #{tpu_custom_call.1} parent=11 // pred_check
          %p218 = pneg %p126
        $region26: #{tpu_custom_call.1} parent=11 // pred_check_branch
          %220 = sbr.rel (%p218) target = $region28
        $region27: #{tpu_custom_call.1} parent=11 // pred_region
          _
        $region28: #{tpu_custom_call.1} parent=11 // pred_fallthru
          _
        // Predicated region
        $region29: #{tpu_custom_call.1} parent=11 // pred_check
          %p221 = pneg %p147
        $region30: #{tpu_custom_call.1} parent=11 // pred_check_branch
          %223 = sbr.rel (%p221) target = $region32
        $region31: #{tpu_custom_call.1} parent=11 // pred_region
          _
        $region32: #{tpu_custom_call.1} parent=11 // pred_fallthru
          _
        // Predicated region
        $region33: #{tpu_custom_call.1} parent=11 // pred_check
          %p224 = pneg %p168
        $region34: #{tpu_custom_call.1} parent=11 // pred_check_branch
          %226 = sbr.rel (%p224) target = $region36
        $region35: #{tpu_custom_call.1} parent=11 // pred_region
          _
        $region36: #{tpu_custom_call.1} parent=11 // pred_fallthru
          _
      $region12: #{tpu_custom_call.1} parent=5 // pred_fallthru
        _
      %p227 = scmp.lt.s32.totalorder %s16, 4
      // Predicated region
      $region37: #{tpu_custom_call.1} parent=5 // pred_check
        %p228 = pneg %p227
      $region38: #{tpu_custom_call.1} parent=5 // pred_check_branch
        %230 = sbr.rel (%p228) target = $region40
      $region39: #{tpu_custom_call.1} parent=5 // pred_region
        // Predicated region
        $region41: #{tpu_custom_call.1} parent=39 // pred_check
          %p231 = pneg %p36
        $region42: #{tpu_custom_call.1} parent=39 // pred_check_branch
          %233 = sbr.rel (%p231) target = $region44
        $region43: #{tpu_custom_call.1} parent=39 // pred_region
          %s234 = smul.u32 32, %s16
          %p235 = scmp.lt.s32.totalorder %s234, 127
          %s236 = scalar_select %p235, %s234, 127
          %s237 = smul.addr %s236, 8
          %s238 = scalar_lea.vmem %s0, %s237
          %s239 = smul.u32 32, %s16
        $region44: #{tpu_custom_call.1} parent=39 // pred_fallthru
          _
      $region40: #{tpu_custom_call.1} parent=5 // pred_fallthru
        _
      %p240 = scmp.le.s32.totalorder 1, %s16
      %p241 = scmp.lt.s32.totalorder %s16, 5
      %p242 = pnand %p240, %p241
      %p243 = pneg %p242
      // Predicated region
      $region45: #{tpu_custom_call.1} parent=5 // pred_check
        _
      $region46: #{tpu_custom_call.1} parent=5 // pred_check_branch
        %245 = sbr.rel (%p242) target = $region48
      $region47: #{tpu_custom_call.1} parent=5 // pred_region
        %s246 = ssub.s32 %s16, 1
        %s247 = smul.u32 32, %s21
        %p248 = scmp.lt.s32.totalorder %s247, 127
        %s249 = scalar_select %p248, %s247, 127
        %s250 = smul.addr %s249, 8
        %s251 = scalar_lea.vmem %s0, %s250
        %p252 = pneg %p42
        %p253 = pneg %p39
        %p254 = pneg %p63
        %p255 = pneg %p60
        %p256 = pneg %p84
        %p257 = pneg %p81
        %p258 = pneg %p105
        %p259 = pneg %p102
        %p260 = pneg %p126
        %p261 = pneg %p123
        %p262 = pneg %p147
        %p263 = pneg %p144
        %p264 = pneg %p168
        %p265 = pneg %p165
        %p266 = pneg %p194
        %p267 = pneg %p191
        %s268 = sand.u32 %s181, 1
        %s269 = scalar_lea.sflag [#allocation3], %s268
        %s270 = sand.u32 %s181, 1
        %s271 = smul.addr %s270, 256
        %s272 = scalar_lea.vmem [#allocation2], %s271
        %s273 = smul.u32 32, %s21
        %p274 = scmp.lt.s32.totalorder %s273, 127
        %s275 = scalar_select %p274, %s273, 127
        %s276 = smul.addr %s275, 8
        %s277 = scalar_lea.vmem %s0, %s276
        %s278 = smul.u32 32, %s21
        %s279 = smul.u32 32, %s21
        %v281 = vld [vmem:[%s277] sm:$0xff]
        %v282 = vld [vmem:[%s277 + $0x8] sm:$0xff]
        %v283 = vld [vmem:[%s277 + $0x10] sm:$0xff]
        %v284 = vld [vmem:[%s277 + $0x18] sm:$0xff]
        %v285 = vld [vmem:[%s277 + $0x20] sm:$0xff]
        %v286 = vld [vmem:[%s277 + $0x28] sm:$0xff]
        %v287 = vld [vmem:[%s277 + $0x30] sm:$0xff]
        %v288 = vld [vmem:[%s277 + $0x38] sm:$0xff]
        %v289 = vld [vmem:[%s277 + $0x40] sm:$0xff]
        %v290 = vld [vmem:[%s277 + $0x48] sm:$0xff]
        %v291 = vld [vmem:[%s277 + $0x50] sm:$0xff]
        %v292 = vld [vmem:[%s277 + $0x58] sm:$0xff]
        %v293 = vld [vmem:[%s277 + $0x60] sm:$0xff]
        %v294 = vld [vmem:[%s277 + $0x68] sm:$0xff]
        %v295 = vld [vmem:[%s277 + $0x70] sm:$0xff]
        %v296 = vld [vmem:[%s277 + $0x78] sm:$0xff]
        %v297 = vld [vmem:[%s277 + $0x80] sm:$0xff]
        %v298 = vld [vmem:[%s277 + $0x88] sm:$0xff]
        %v299 = vld [vmem:[%s277 + $0x90] sm:$0xff]
        %v300 = vld [vmem:[%s277 + $0x98] sm:$0xff]
        %v301 = vld [vmem:[%s277 + $0xa0] sm:$0xff]
        %v302 = vld [vmem:[%s277 + $0xa8] sm:$0xff]
        %v303 = vld [vmem:[%s277 + $0xb0] sm:$0xff]
        %v304 = vld [vmem:[%s277 + $0xb8] sm:$0xff]
        %v305 = vld [vmem:[%s277 + $0xc0] sm:$0xff]
        %v306 = vld [vmem:[%s277 + $0xc8] sm:$0xff]
        %v307 = vld [vmem:[%s277 + $0xd0] sm:$0xff]
        %v308 = vld [vmem:[%s277 + $0xd8] sm:$0xff]
        %v309 = vld [vmem:[%s277 + $0xe0] sm:$0xff]
        %v310 = vld [vmem:[%s277 + $0xe8] sm:$0xff]
        %v311 = vld [vmem:[%s277 + $0xf0] sm:$0xff]
        %v312 = vld [vmem:[%s277 + $0xf8] sm:$0xff]
        %v313 = vpack.c.bf16 %v282, %v281
        %v314 = vpack.c.bf16 %v284, %v283
        %v315 = vpack.c.bf16 %v286, %v285
        %v316 = vpack.c.bf16 %v288, %v287
        %v317 = vpack.c.bf16 %v290, %v289
        %v318 = vpack.c.bf16 %v292, %v291
        %v319 = vpack.c.bf16 %v294, %v293
        %v320 = vpack.c.bf16 %v296, %v295
        %v321 = vpack.c.bf16 %v298, %v297
        %v322 = vpack.c.bf16 %v300, %v299
        %v323 = vpack.c.bf16 %v302, %v301
        %v324 = vpack.c.bf16 %v304, %v303
        %v325 = vpack.c.bf16 %v306, %v305
        %v326 = vpack.c.bf16 %v308, %v307
        %v327 = vpack.c.bf16 %v310, %v309
        %v328 = vpack.c.bf16 %v312, %v311
        %v329 = vld [vmem:[%s1] sm:$0xf]
        %v330 = vld [vmem:[%s1 + $0x4] sm:$0xf]
        %v331 = vld [vmem:[%s2] sm:$0x1]
        %v333 = vlaneseq
        %v334 = vshrl.u32 %v333, 7
        %v335 = vsub.s32 0, %v334
        %v336 = vrot.slane %v331, %v335
        %v340 = vunpack.c.l.b16 %v329
        %v341 = vunpack.c.l.b16 %v330
        %v342 = vpack.c.b16 %v341, %v340
        %vm344 = vcmask 130048
        %v346 = vsel %vm344, %v313, 0
        %v349 = vsel %vm344, %v314, 0
        %v352 = vsel %vm344, %v315, 0
        %v355 = vsel %vm344, %v316, 0
        %v358 = vsel %vm344, %v317, 0
        %v361 = vsel %vm344, %v318, 0
        %v364 = vsel %vm344, %v319, 0
        %v367 = vsel %vm344, %v320, 0
        %v370 = vsel %vm344, %v321, 0
        %v373 = vsel %vm344, %v322, 0
        %v376 = vsel %vm344, %v323, 0
        %v379 = vsel %vm344, %v324, 0
        %v382 = vsel %vm344, %v325, 0
        %v385 = vsel %vm344, %v326, 0
        %v388 = vsel %vm344, %v327, 0
        %v391 = vsel %vm344, %v328, 0
        %393 = vmatprep.subr.bf16.mxu0 0
        %394 = vmatpush1.bf16.msra.mxu0 %v342
        %395 = vmatprep.subr.bf16.mxu0 0
        %396 = vmatpush1.bf16.msra.mxu0 0
        %397 = vmatprep.subr.bf16.mxu0 0
        %398 = vmatpush1.bf16.msra.mxu0 0
        %399 = vmatprep.subr.bf16.mxu0 0
        %400 = vmatpush1.bf16.msra.mxu0 0
        %401 = vmatprep.subr.bf16.mxu0 0
        %402 = vmatpush1.bf16.msra.mxu0 0
        %403 = vmatprep.subr.bf16.mxu0 0
        %404 = vmatpush1.bf16.msra.mxu0 0
        %405 = vmatprep.subr.bf16.mxu0 0
        %406 = vmatpush1.bf16.msra.mxu0 0
        %407 = vmatprep.subr.bf16.mxu0 0
        %408 = vmatpush1.bf16.msra.mxu0 0
        %409 = vmatprep.subr.bf16.mxu0 0
        %410 = vmatpush1.bf16.msra.mxu0 0
        %411 = vmatprep.subr.bf16.mxu0 0
        %412 = vmatpush1.bf16.msra.mxu0 0
        %413 = vmatprep.subr.bf16.mxu0 0
        %414 = vmatpush1.bf16.msra.mxu0 0
        %415 = vmatprep.subr.bf16.mxu0 0
        %416 = vmatpush1.bf16.msra.mxu0 0
        %417 = vmatprep.subr.bf16.mxu0 0
        %418 = vmatpush1.bf16.msra.mxu0 0
        %419 = vmatprep.subr.bf16.mxu0 0
        %420 = vmatpush1.bf16.msra.mxu0 0
        %421 = vmatprep.subr.bf16.mxu0 0
        %422 = vmatpush1.bf16.msra.mxu0 0
        %423 = vmatprep.subr.bf16.mxu0 0
        %424 = vmatpush1.bf16.msra.mxu0 0
        %425 = vmatprep.mubr.bf16.mxu0 0
        %426 = vmatmul.mubr.bf16.gmra.mrb[0].mxu0 %v346
        %v427 = vpop.f32.mrb[0].mxu0
        %v428 = vadd.f32 %v336, %v427
        %v429 = vpop.f32.mrb[0].mxu0
        %v430 = vpop.f32.mrb[0].mxu0
        %v431 = vadd.f32 %v336, %v430
        %v432 = vpop.f32.mrb[0].mxu0
        %433 = vmatprep.mubr.bf16.mxu0 0
        %434 = vmatmul.mubr.bf16.gmra.mrb[0].mxu0 %v349
        %v435 = vpop.f32.mrb[0].mxu0
        %v436 = vadd.f32 %v336, %v435
        %v437 = vpop.f32.mrb[0].mxu0
        %v438 = vpop.f32.mrb[0].mxu0
        %v439 = vadd.f32 %v336, %v438
        %v440 = vpop.f32.mrb[0].mxu0
        %441 = vmatprep.mubr.bf16.mxu0 0
        %442 = vmatmul.mubr.bf16.gmra.mrb[0].mxu0 %v352
        %v443 = vpop.f32.mrb[0].mxu0
        %v444 = vadd.f32 %v336, %v443
        %v445 = vpop.f32.mrb[0].mxu0
        %v446 = vpop.f32.mrb[0].mxu0
        %v447 = vadd.f32 %v336, %v446
        %v448 = vpop.f32.mrb[0].mxu0
        %449 = vmatprep.mubr.bf16.mxu0 0
        %450 = vmatmul.mubr.bf16.gmra.mrb[0].mxu0 %v355
        %v451 = vpop.f32.mrb[0].mxu0
        %v452 = vadd.f32 %v336, %v451
        %v453 = vpop.f32.mrb[0].mxu0
        %v454 = vpop.f32.mrb[0].mxu0
        %v455 = vadd.f32 %v336, %v454
        %v456 = vpop.f32.mrb[0].mxu0
        %457 = vmatprep.mubr.bf16.mxu0 0
        %458 = vmatmul.mubr.bf16.gmra.mrb[0].mxu0 %v358
        %v459 = vpop.f32.mrb[0].mxu0
        %v460 = vadd.f32 %v336, %v459
        %v461 = vpop.f32.mrb[0].mxu0
        %v462 = vpop.f32.mrb[0].mxu0
        %v463 = vadd.f32 %v336, %v462
        %v464 = vpop.f32.mrb[0].mxu0
        %465 = vmatprep.mubr.bf16.mxu0 0
        %466 = vmatmul.mubr.bf16.gmra.mrb[0].mxu0 %v361
        %v467 = vpop.f32.mrb[0].mxu0
        %v468 = vadd.f32 %v336, %v467
        %v469 = vpop.f32.mrb[0].mxu0
        %v470 = vpop.f32.mrb[0].mxu0
        %v471 = vadd.f32 %v336, %v470
        %v472 = vpop.f32.mrb[0].mxu0
        %473 = vmatprep.mubr.bf16.mxu0 0
        %474 = vmatmul.mubr.bf16.gmra.mrb[0].mxu0 %v364
        %v475 = vpop.f32.mrb[0].mxu0
        %v476 = vadd.f32 %v336, %v475
        %v477 = vpop.f32.mrb[0].mxu0
        %v478 = vpop.f32.mrb[0].mxu0
        %v479 = vadd.f32 %v336, %v478
        %v480 = vpop.f32.mrb[0].mxu0
        %481 = vmatprep.mubr.bf16.mxu0 0
        %482 = vmatmul.mubr.bf16.gmra.mrb[0].mxu0 %v367
        %v483 = vpop.f32.mrb[0].mxu0
        %v484 = vadd.f32 %v336, %v483
        %v485 = vpop.f32.mrb[0].mxu0
        %v486 = vpop.f32.mrb[0].mxu0
        %v487 = vadd.f32 %v336, %v486
        %v488 = vpop.f32.mrb[0].mxu0
        %489 = vmatprep.mubr.bf16.mxu0 0
        %490 = vmatmul.mubr.bf16.gmra.mrb[0].mxu0 %v370
        %v491 = vpop.f32.mrb[0].mxu0
        %v492 = vadd.f32 %v336, %v491
        %v493 = vpop.f32.mrb[0].mxu0
        %v494 = vpop.f32.mrb[0].mxu0
        %v495 = vadd.f32 %v336, %v494
        %v496 = vpop.f32.mrb[0].mxu0
        %497 = vmatprep.mubr.bf16.mxu0 0
        %498 = vmatmul.mubr.bf16.gmra.mrb[0].mxu0 %v373
        %v499 = vpop.f32.mrb[0].mxu0
        %v500 = vadd.f32 %v336, %v499
        %v501 = vpop.f32.mrb[0].mxu0
        %v502 = vpop.f32.mrb[0].mxu0
        %v503 = vadd.f32 %v336, %v502
        %v504 = vpop.f32.mrb[0].mxu0
        %505 = vmatprep.mubr.bf16.mxu0 0
        %506 = vmatmul.mubr.bf16.gmra.mrb[0].mxu0 %v376
        %v507 = vpop.f32.mrb[0].mxu0
        %v508 = vadd.f32 %v336, %v507
        %v509 = vpop.f32.mrb[0].mxu0
        %v510 = vpop.f32.mrb[0].mxu0
        %v511 = vadd.f32 %v336, %v510
        %v512 = vpop.f32.mrb[0].mxu0
        %513 = vmatprep.mubr.bf16.mxu0 0
        %514 = vmatmul.mubr.bf16.gmra.mrb[0].mxu0 %v379
        %v515 = vpop.f32.mrb[0].mxu0
        %v516 = vadd.f32 %v336, %v515
        %v517 = vpop.f32.mrb[0].mxu0
        %v518 = vpop.f32.mrb[0].mxu0
        %v519 = vadd.f32 %v336, %v518
        %v520 = vpop.f32.mrb[0].mxu0
        %521 = vmatprep.mubr.bf16.mxu0 0
        %522 = vmatmul.mubr.bf16.gmra.mrb[0].mxu0 %v382
        %v523 = vpop.f32.mrb[0].mxu0
        %v524 = vadd.f32 %v336, %v523
        %v525 = vpop.f32.mrb[0].mxu0
        %v526 = vpop.f32.mrb[0].mxu0
        %v527 = vadd.f32 %v336, %v526
        %v528 = vpop.f32.mrb[0].mxu0
        %529 = vmatprep.mubr.bf16.mxu0 0
        %530 = vmatmul.mubr.bf16.gmra.mrb[0].mxu0 %v385
        %v531 = vpop.f32.mrb[0].mxu0
        %v532 = vadd.f32 %v336, %v531
        %v533 = vpop.f32.mrb[0].mxu0
        %v534 = vpop.f32.mrb[0].mxu0
        %v535 = vadd.f32 %v336, %v534
        %v536 = vpop.f32.mrb[0].mxu0
        %537 = vmatprep.mubr.bf16.mxu0 0
        %538 = vmatmul.mubr.bf16.gmra.mrb[0].mxu0 %v388
        %v539 = vpop.f32.mrb[0].mxu0
        %v540 = vadd.f32 %v336, %v539
        %v541 = vpop.f32.mrb[0].mxu0
        %v542 = vpop.f32.mrb[0].mxu0
        %v543 = vadd.f32 %v336, %v542
        %v544 = vpop.f32.mrb[0].mxu0
        %545 = vmatprep.mubr.bf16.mxu0 0
        %546 = vmatmul.mubr.bf16.gmra.mrb[0].mxu0 %v391
        %v547 = vpop.f32.mrb[0].mxu0
        %v548 = vadd.f32 %v336, %v547
        %v549 = vpop.f32.mrb[0].mxu0
        %v550 = vpop.f32.mrb[0].mxu0
        %v551 = vadd.f32 %v336, %v550
        %v552 = vpop.f32.mrb[0].mxu0
        %553 = vdwg.mxu0
        %v554 = vmax.f32 %v428, 0.0
        %v555 = vmax.f32 %v431, 0.0
        %v556 = vmax.f32 %v436, 0.0
        %v557 = vmax.f32 %v439, 0.0
        %v558 = vmax.f32 %v444, 0.0
        %v559 = vmax.f32 %v447, 0.0
        %v560 = vmax.f32 %v452, 0.0
        %v561 = vmax.f32 %v455, 0.0
        %v562 = vmax.f32 %v460, 0.0
        %v563 = vmax.f32 %v463, 0.0
        %v564 = vmax.f32 %v468, 0.0
        %v565 = vmax.f32 %v471, 0.0
        %v566 = vmax.f32 %v476, 0.0
        %v567 = vmax.f32 %v479, 0.0
        %v568 = vmax.f32 %v484, 0.0
        %v569 = vmax.f32 %v487, 0.0
        %v570 = vmax.f32 %v492, 0.0
        %v571 = vmax.f32 %v495, 0.0
        %v572 = vmax.f32 %v500, 0.0
        %v573 = vmax.f32 %v503, 0.0
        %v574 = vmax.f32 %v508, 0.0
        %v575 = vmax.f32 %v511, 0.0
        %v576 = vmax.f32 %v516, 0.0
        %v577 = vmax.f32 %v519, 0.0
        %v578 = vmax.f32 %v524, 0.0
        %v579 = vmax.f32 %v527, 0.0
        %v580 = vmax.f32 %v532, 0.0
        %v581 = vmax.f32 %v535, 0.0
        %v582 = vmax.f32 %v540, 0.0
        %v583 = vmax.f32 %v543, 0.0
        %v584 = vmax.f32 %v548, 0.0
        %v585 = vmax.f32 %v551, 0.0
        %v586 = vpack.c.bf16 %v555, %v554
        %v587 = vpack.c.bf16 %v557, %v556
        %v588 = vpack.c.bf16 %v559, %v558
        %v589 = vpack.c.bf16 %v561, %v560
        %v590 = vpack.c.bf16 %v563, %v562
        %v591 = vpack.c.bf16 %v565, %v564
        %v592 = vpack.c.bf16 %v567, %v566
        %v593 = vpack.c.bf16 %v569, %v568
        %v594 = vpack.c.bf16 %v571, %v570
        %v595 = vpack.c.bf16 %v573, %v572
        %v596 = vpack.c.bf16 %v575, %v574
        %v597 = vpack.c.bf16 %v577, %v576
        %v598 = vpack.c.bf16 %v579, %v578
        %v599 = vpack.c.bf16 %v581, %v580
        %v600 = vpack.c.bf16 %v583, %v582
        %v601 = vpack.c.bf16 %v585, %v584
        %v602 = vld [vmem:[%s3] sm:$0xf]
        %v603 = vld [vmem:[%s3 + $0x4] sm:$0xf]
        %v604 = vld [vmem:[%s3 + $0x8] sm:$0xf]
        %v605 = vld [vmem:[%s3 + $0xc] sm:$0xf]
        %v606 = vld [vmem:[%s3 + $0x10] sm:$0xf]
        %v607 = vld [vmem:[%s3 + $0x14] sm:$0xf]
        %v608 = vld [vmem:[%s3 + $0x18] sm:$0xf]
        %v609 = vld [vmem:[%s3 + $0x1c] sm:$0xf]
        %v610 = vld [vmem:[%s3 + $0x20] sm:$0xf]
        %v611 = vld [vmem:[%s3 + $0x24] sm:$0xf]
        %v612 = vld [vmem:[%s3 + $0x28] sm:$0xf]
        %v613 = vld [vmem:[%s3 + $0x2c] sm:$0xf]
        %v614 = vld [vmem:[%s3 + $0x30] sm:$0xf]
        %v615 = vld [vmem:[%s3 + $0x34] sm:$0xf]
        %v616 = vld [vmem:[%s3 + $0x38] sm:$0xf]
        %v617 = vld [vmem:[%s3 + $0x3c] sm:$0xf]
        %v618 = vld [vmem:[%s4] sm:$0x1]
        %v620 = vlaneseq
        %v621 = vshrl.u32 %v620, 7
        %v622 = vsub.s32 0, %v621
        %v623 = vrot.slane %v618, %v622
        %v641 = vunpack.c.l.b16 %v602
        %v642 = vunpack.c.l.b16 %v603
        %v643 = vunpack.c.l.b16 %v604
        %v644 = vunpack.c.l.b16 %v605
        %v645 = vunpack.c.l.b16 %v606
        %v646 = vunpack.c.l.b16 %v607
        %v647 = vunpack.c.l.b16 %v608
        %v648 = vunpack.c.l.b16 %v609
        %v649 = vunpack.c.l.b16 %v610
        %v650 = vunpack.c.l.b16 %v611
        %v651 = vunpack.c.l.b16 %v612
        %v652 = vunpack.c.l.b16 %v613
        %v653 = vunpack.c.l.b16 %v614
        %v654 = vunpack.c.l.b16 %v615
        %v655 = vunpack.c.l.b16 %v616
        %v656 = vunpack.c.l.b16 %v617
        %v657 = vpack.c.b16 %v642, %v641
        %v658 = vpack.c.b16 %v644, %v643
        %v659 = vpack.c.b16 %v646, %v645
        %v660 = vpack.c.b16 %v648, %v647
        %v661 = vpack.c.b16 %v650, %v649
        %v662 = vpack.c.b16 %v652, %v651
        %v663 = vpack.c.b16 %v654, %v653
        %v664 = vpack.c.b16 %v656, %v655
        %673 = vmatprep.subr.bf16.mxu0 0
        %674 = vmatpush1.bf16.msra.mxu0 %v657
        %675 = vmatprep.subr.bf16.mxu0 0
        %676 = vmatpush1.bf16.msra.mxu0 %v658
        %677 = vmatprep.subr.bf16.mxu0 0
        %678 = vmatpush1.bf16.msra.mxu0 %v659
        %679 = vmatprep.subr.bf16.mxu0 0
        %680 = vmatpush1.bf16.msra.mxu0 %v660
        %681 = vmatprep.subr.bf16.mxu0 0
        %682 = vmatpush1.bf16.msra.mxu0 %v661
        %683 = vmatprep.subr.bf16.mxu0 0
        %684 = vmatpush1.bf16.msra.mxu0 %v662
        %685 = vmatprep.subr.bf16.mxu0 0
        %686 = vmatpush1.bf16.msra.mxu0 %v663
        %687 = vmatprep.subr.bf16.mxu0 0
        %688 = vmatpush1.bf16.msra.mxu0 %v664
        %689 = vmatprep.subr.bf16.mxu0 0
        %690 = vmatpush1.bf16.msra.mxu0 0
        %691 = vmatprep.subr.bf16.mxu0 0
        %692 = vmatpush1.bf16.msra.mxu0 0
        %693 = vmatprep.subr.bf16.mxu0 0
        %694 = vmatpush1.bf16.msra.mxu0 0
        %695 = vmatprep.subr.bf16.mxu0 0
        %696 = vmatpush1.bf16.msra.mxu0 0
        %697 = vmatprep.subr.bf16.mxu0 0
        %698 = vmatpush1.bf16.msra.mxu0 0
        %699 = vmatprep.subr.bf16.mxu0 0
        %700 = vmatpush1.bf16.msra.mxu0 0
        %701 = vmatprep.subr.bf16.mxu0 0
        %702 = vmatpush1.bf16.msra.mxu0 0
        %703 = vmatprep.subr.bf16.mxu0 0
        %704 = vmatpush1.bf16.msra.mxu0 0
        %705 = vmatprep.mubr.bf16.mxu0 0
        %706 = vmatmul.mubr.bf16.gmra.mrb[0].mxu0 %v586
        %v707 = vpop.f32.mrb[0].mxu0
        %v708 = vadd.f32 %v623, %v707
        %v709 = vpop.f32.mrb[0].mxu0
        %v710 = vpop.f32.mrb[0].mxu0
        %v711 = vadd.f32 %v623, %v710
        %v712 = vpop.f32.mrb[0].mxu0
        %713 = vmatprep.mubr.bf16.mxu0 0
        %714 = vmatmul.mubr.bf16.gmra.mrb[0].mxu0 %v587
        %v715 = vpop.f32.mrb[0].mxu0
        %v716 = vadd.f32 %v623, %v715
        %v717 = vpop.f32.mrb[0].mxu0
        %v718 = vpop.f32.mrb[0].mxu0
        %v719 = vadd.f32 %v623, %v718
        %v720 = vpop.f32.mrb[0].mxu0
        %721 = vmatprep.mubr.bf16.mxu0 0
        %722 = vmatmul.mubr.bf16.gmra.mrb[0].mxu0 %v588
        %v723 = vpop.f32.mrb[0].mxu0
        %v724 = vadd.f32 %v623, %v723
        %v725 = vpop.f32.mrb[0].mxu0
        %v726 = vpop.f32.mrb[0].mxu0
        %v727 = vadd.f32 %v623, %v726
        %v728 = vpop.f32.mrb[0].mxu0
        %729 = vmatprep.mubr.bf16.mxu0 0
        %730 = vmatmul.mubr.bf16.gmra.mrb[0].mxu0 %v589
        %v731 = vpop.f32.mrb[0].mxu0
        %v732 = vadd.f32 %v623, %v731
        %v733 = vpop.f32.mrb[0].mxu0
        %v734 = vpop.f32.mrb[0].mxu0
        %v735 = vadd.f32 %v623, %v734
        %v736 = vpop.f32.mrb[0].mxu0
        %737 = vmatprep.mubr.bf16.mxu0 0
        %738 = vmatmul.mubr.bf16.gmra.mrb[0].mxu0 %v590
        %v739 = vpop.f32.mrb[0].mxu0
        %v740 = vadd.f32 %v623, %v739
        %v741 = vpop.f32.mrb[0].mxu0
        %v742 = vpop.f32.mrb[0].mxu0
        %v743 = vadd.f32 %v623, %v742
        %v744 = vpop.f32.mrb[0].mxu0
        %745 = vmatprep.mubr.bf16.mxu0 0
        %746 = vmatmul.mubr.bf16.gmra.mrb[0].mxu0 %v591
        %v747 = vpop.f32.mrb[0].mxu0
        %v748 = vadd.f32 %v623, %v747
        %v749 = vpop.f32.mrb[0].mxu0
        %v750 = vpop.f32.mrb[0].mxu0
        %v751 = vadd.f32 %v623, %v750
        %v752 = vpop.f32.mrb[0].mxu0
        %753 = vmatprep.mubr.bf16.mxu0 0
        %754 = vmatmul.mubr.bf16.gmra.mrb[0].mxu0 %v592
        %v755 = vpop.f32.mrb[0].mxu0
        %v756 = vadd.f32 %v623, %v755
        %v757 = vpop.f32.mrb[0].mxu0
        %v758 = vpop.f32.mrb[0].mxu0
        %v759 = vadd.f32 %v623, %v758
        %v760 = vpop.f32.mrb[0].mxu0
        %761 = vmatprep.mubr.bf16.mxu0 0
        %762 = vmatmul.mubr.bf16.gmra.mrb[0].mxu0 %v593
        %v763 = vpop.f32.mrb[0].mxu0
        %v764 = vadd.f32 %v623, %v763
        %v765 = vpop.f32.mrb[0].mxu0
        %v766 = vpop.f32.mrb[0].mxu0
        %v767 = vadd.f32 %v623, %v766
        %v768 = vpop.f32.mrb[0].mxu0
        %769 = vmatprep.mubr.bf16.mxu0 0
        %770 = vmatmul.mubr.bf16.gmra.mrb[0].mxu0 %v594
        %v771 = vpop.f32.mrb[0].mxu0
        %v772 = vadd.f32 %v623, %v771
        %v773 = vpop.f32.mrb[0].mxu0
        %v774 = vpop.f32.mrb[0].mxu0
        %v775 = vadd.f32 %v623, %v774
        %v776 = vpop.f32.mrb[0].mxu0
        %777 = vmatprep.mubr.bf16.mxu0 0
        %778 = vmatmul.mubr.bf16.gmra.mrb[0].mxu0 %v595
        %v779 = vpop.f32.mrb[0].mxu0
        %v780 = vadd.f32 %v623, %v779
        %v781 = vpop.f32.mrb[0].mxu0
        %v782 = vpop.f32.mrb[0].mxu0
        %v783 = vadd.f32 %v623, %v782
        %v784 = vpop.f32.mrb[0].mxu0
        %785 = vmatprep.mubr.bf16.mxu0 0
        %786 = vmatmul.mubr.bf16.gmra.mrb[0].mxu0 %v596
        %v787 = vpop.f32.mrb[0].mxu0
        %v788 = vadd.f32 %v623, %v787
        %v789 = vpop.f32.mrb[0].mxu0
        %v790 = vpop.f32.mrb[0].mxu0
        %v791 = vadd.f32 %v623, %v790
        %v792 = vpop.f32.mrb[0].mxu0
        %793 = vmatprep.mubr.bf16.mxu0 0
        %794 = vmatmul.mubr.bf16.gmra.mrb[0].mxu0 %v597
        %v795 = vpop.f32.mrb[0].mxu0
        %v796 = vadd.f32 %v623, %v795
        %v797 = vpop.f32.mrb[0].mxu0
        %v798 = vpop.f32.mrb[0].mxu0
        %v799 = vadd.f32 %v623, %v798
        %v800 = vpop.f32.mrb[0].mxu0
        %801 = vmatprep.mubr.bf16.mxu0 0
        %802 = vmatmul.mubr.bf16.gmra.mrb[0].mxu0 %v598
        %v803 = vpop.f32.mrb[0].mxu0
        %v804 = vadd.f32 %v623, %v803
        %v805 = vpop.f32.mrb[0].mxu0
        %v806 = vpop.f32.mrb[0].mxu0
        %v807 = vadd.f32 %v623, %v806
        %v808 = vpop.f32.mrb[0].mxu0
        %809 = vmatprep.mubr.bf16.mxu0 0
        %810 = vmatmul.mubr.bf16.gmra.mrb[0].mxu0 %v599
        %v811 = vpop.f32.mrb[0].mxu0
        %v812 = vadd.f32 %v623, %v811
        %v813 = vpop.f32.mrb[0].mxu0
        %v814 = vpop.f32.mrb[0].mxu0
        %v815 = vadd.f32 %v623, %v814
        %v816 = vpop.f32.mrb[0].mxu0
        %817 = vmatprep.mubr.bf16.mxu0 0
        %818 = vmatmul.mubr.bf16.gmra.mrb[0].mxu0 %v600
        %v819 = vpop.f32.mrb[0].mxu0
        %v820 = vadd.f32 %v623, %v819
        %v821 = vpop.f32.mrb[0].mxu0
        %v822 = vpop.f32.mrb[0].mxu0
        %v823 = vadd.f32 %v623, %v822
        %v824 = vpop.f32.mrb[0].mxu0
        %825 = vmatprep.mubr.bf16.mxu0 0
        %826 = vmatmul.mubr.bf16.gmra.mrb[0].mxu0 %v601
        %v827 = vpop.f32.mrb[0].mxu0
        %v828 = vadd.f32 %v623, %v827
        %v829 = vpop.f32.mrb[0].mxu0
        %v830 = vpop.f32.mrb[0].mxu0
        %v831 = vadd.f32 %v623, %v830
        %v832 = vpop.f32.mrb[0].mxu0
        %833 = vdwg.mxu0
        %v834 = vmax.f32 %v708, 0.0
        %v835 = vmax.f32 %v711, 0.0
        %v836 = vmax.f32 %v716, 0.0
        %v837 = vmax.f32 %v719, 0.0
        %v838 = vmax.f32 %v724, 0.0
        %v839 = vmax.f32 %v727, 0.0
        %v840 = vmax.f32 %v732, 0.0
        %v841 = vmax.f32 %v735, 0.0
        %v842 = vmax.f32 %v740, 0.0
        %v843 = vmax.f32 %v743, 0.0
        %v844 = vmax.f32 %v748, 0.0
        %v845 = vmax.f32 %v751, 0.0
        %v846 = vmax.f32 %v756, 0.0
        %v847 = vmax.f32 %v759, 0.0
        %v848 = vmax.f32 %v764, 0.0
        %v849 = vmax.f32 %v767, 0.0
        %v850 = vmax.f32 %v772, 0.0
        %v851 = vmax.f32 %v775, 0.0
        %v852 = vmax.f32 %v780, 0.0
        %v853 = vmax.f32 %v783, 0.0
        %v854 = vmax.f32 %v788, 0.0
        %v855 = vmax.f32 %v791, 0.0
        %v856 = vmax.f32 %v796, 0.0
        %v857 = vmax.f32 %v799, 0.0
        %v858 = vmax.f32 %v804, 0.0
        %v859 = vmax.f32 %v807, 0.0
        %v860 = vmax.f32 %v812, 0.0
        %v861 = vmax.f32 %v815, 0.0
        %v862 = vmax.f32 %v820, 0.0
        %v863 = vmax.f32 %v823, 0.0
        %v864 = vmax.f32 %v828, 0.0
        %v865 = vmax.f32 %v831, 0.0
        %v866 = vpack.c.bf16 %v835, %v834
        %v867 = vpack.c.bf16 %v837, %v836
        %v868 = vpack.c.bf16 %v839, %v838
        %v869 = vpack.c.bf16 %v841, %v840
        %v870 = vpack.c.bf16 %v843, %v842
        %v871 = vpack.c.bf16 %v845, %v844
        %v872 = vpack.c.bf16 %v847, %v846
        %v873 = vpack.c.bf16 %v849, %v848
        %v874 = vpack.c.bf16 %v851, %v850
        %v875 = vpack.c.bf16 %v853, %v852
        %v876 = vpack.c.bf16 %v855, %v854
        %v877 = vpack.c.bf16 %v857, %v856
        %v878 = vpack.c.bf16 %v859, %v858
        %v879 = vpack.c.bf16 %v861, %v860
        %v880 = vpack.c.bf16 %v863, %v862
        %v881 = vpack.c.bf16 %v865, %v864
        %v882 = vld [vmem:[%s5] sm:$0xf]
        %v883 = vld [vmem:[%s5 + $0x4] sm:$0xf]
        %v884 = vld [vmem:[%s5 + $0x8] sm:$0xf]
        %v885 = vld [vmem:[%s5 + $0xc] sm:$0xf]
        %v886 = vld [vmem:[%s5 + $0x10] sm:$0xf]
        %v887 = vld [vmem:[%s5 + $0x14] sm:$0xf]
        %v888 = vld [vmem:[%s5 + $0x18] sm:$0xf]
        %v889 = vld [vmem:[%s5 + $0x1c] sm:$0xf]
        %v890 = vld [vmem:[%s5 + $0x20] sm:$0xf]
        %v891 = vld [vmem:[%s5 + $0x24] sm:$0xf]
        %v892 = vld [vmem:[%s5 + $0x28] sm:$0xf]
        %v893 = vld [vmem:[%s5 + $0x2c] sm:$0xf]
        %v894 = vld [vmem:[%s5 + $0x30] sm:$0xf]
        %v895 = vld [vmem:[%s5 + $0x34] sm:$0xf]
        %v896 = vld [vmem:[%s5 + $0x38] sm:$0xf]
        %v897 = vld [vmem:[%s5 + $0x3c] sm:$0xf]
        %v898 = vld [vmem:[%s6] sm:$0x1]
        %v900 = vlaneseq
        %v901 = vshrl.u32 %v900, 7
        %v902 = vsub.s32 0, %v901
        %v903 = vrot.slane %v898, %v902
        %v921 = vunpack.c.l.b16 %v882
        %v922 = vunpack.c.l.b16 %v883
        %v923 = vunpack.c.l.b16 %v884
        %v924 = vunpack.c.l.b16 %v885
        %v925 = vunpack.c.l.b16 %v886
        %v926 = vunpack.c.l.b16 %v887
        %v927 = vunpack.c.l.b16 %v888
        %v928 = vunpack.c.l.b16 %v889
        %v929 = vunpack.c.l.b16 %v890
        %v930 = vunpack.c.l.b16 %v891
        %v931 = vunpack.c.l.b16 %v892
        %v932 = vunpack.c.l.b16 %v893
        %v933 = vunpack.c.l.b16 %v894
        %v934 = vunpack.c.l.b16 %v895
        %v935 = vunpack.c.l.b16 %v896
        %v936 = vunpack.c.l.b16 %v897
        %v937 = vpack.c.b16 %v922, %v921
        %v938 = vpack.c.b16 %v924, %v923
        %v939 = vpack.c.b16 %v926, %v925
        %v940 = vpack.c.b16 %v928, %v927
        %v941 = vpack.c.b16 %v930, %v929
        %v942 = vpack.c.b16 %v932, %v931
        %v943 = vpack.c.b16 %v934, %v933
        %v944 = vpack.c.b16 %v936, %v935
        %953 = vmatprep.subr.bf16.mxu0 0
        %954 = vmatpush1.bf16.msra.mxu0 %v937
        %955 = vmatprep.subr.bf16.mxu0 0
        %956 = vmatpush1.bf16.msra.mxu0 %v938
        %957 = vmatprep.subr.bf16.mxu0 0
        %958 = vmatpush1.bf16.msra.mxu0 %v939
        %959 = vmatprep.subr.bf16.mxu0 0
        %960 = vmatpush1.bf16.msra.mxu0 %v940
        %961 = vmatprep.subr.bf16.mxu0 0
        %962 = vmatpush1.bf16.msra.mxu0 %v941
        %963 = vmatprep.subr.bf16.mxu0 0
        %964 = vmatpush1.bf16.msra.mxu0 %v942
        %965 = vmatprep.subr.bf16.mxu0 0
        %966 = vmatpush1.bf16.msra.mxu0 %v943
        %967 = vmatprep.subr.bf16.mxu0 0
        %968 = vmatpush1.bf16.msra.mxu0 %v944
        %969 = vmatprep.subr.bf16.mxu0 0
        %970 = vmatpush1.bf16.msra.mxu0 0
        %971 = vmatprep.subr.bf16.mxu0 0
        %972 = vmatpush1.bf16.msra.mxu0 0
        %973 = vmatprep.subr.bf16.mxu0 0
        %974 = vmatpush1.bf16.msra.mxu0 0
        %975 = vmatprep.subr.bf16.mxu0 0
        %976 = vmatpush1.bf16.msra.mxu0 0
        %977 = vmatprep.subr.bf16.mxu0 0
        %978 = vmatpush1.bf16.msra.mxu0 0
        %979 = vmatprep.subr.bf16.mxu0 0
        %980 = vmatpush1.bf16.msra.mxu0 0
        %981 = vmatprep.subr.bf16.mxu0 0
        %982 = vmatpush1.bf16.msra.mxu0 0
        %983 = vmatprep.subr.bf16.mxu0 0
        %984 = vmatpush1.bf16.msra.mxu0 0
        %985 = vmatprep.mubr.bf16.mxu0 0
        %986 = vmatmul.mubr.bf16.gmra.mrb[0].mxu0 %v866
        %v987 = vpop.f32.mrb[0].mxu0
        %v988 = vadd.f32 %v903, %v987
        %v989 = vpop.f32.mrb[0].mxu0
        %v990 = vpop.f32.mrb[0].mxu0
        %v991 = vadd.f32 %v903, %v990
        %v992 = vpop.f32.mrb[0].mxu0
        %993 = vmatprep.mubr.bf16.mxu0 0
        %994 = vmatmul.mubr.bf16.gmra.mrb[0].mxu0 %v867
        %v995 = vpop.f32.mrb[0].mxu0
        %v996 = vadd.f32 %v903, %v995
        %v997 = vpop.f32.mrb[0].mxu0
        %v998 = vpop.f32.mrb[0].mxu0
        %v999 = vadd.f32 %v903, %v998
        %v1000 = vpop.f32.mrb[0].mxu0
        %1001 = vmatprep.mubr.bf16.mxu0 0
        %1002 = vmatmul.mubr.bf16.gmra.mrb[0].mxu0 %v868
        %v1003 = vpop.f32.mrb[0].mxu0
        %v1004 = vadd.f32 %v903, %v1003
        %v1005 = vpop.f32.mrb[0].mxu0
        %v1006 = vpop.f32.mrb[0].mxu0
        %v1007 = vadd.f32 %v903, %v1006
        %v1008 = vpop.f32.mrb[0].mxu0
        %1009 = vmatprep.mubr.bf16.mxu0 0
        %1010 = vmatmul.mubr.bf16.gmra.mrb[0].mxu0 %v869
        %v1011 = vpop.f32.mrb[0].mxu0
        %v1012 = vadd.f32 %v903, %v1011
        %v1013 = vpop.f32.mrb[0].mxu0
        %v1014 = vpop.f32.mrb[0].mxu0
        %v1015 = vadd.f32 %v903, %v1014
        %v1016 = vpop.f32.mrb[0].mxu0
        %1017 = vmatprep.mubr.bf16.mxu0 0
        %1018 = vmatmul.mubr.bf16.gmra.mrb[0].mxu0 %v870
        %v1019 = vpop.f32.mrb[0].mxu0
        %v1020 = vadd.f32 %v903, %v1019
        %v1021 = vpop.f32.mrb[0].mxu0
        %v1022 = vpop.f32.mrb[0].mxu0
        %v1023 = vadd.f32 %v903, %v1022
        %v1024 = vpop.f32.mrb[0].mxu0
        %1025 = vmatprep.mubr.bf16.mxu0 0
        %1026 = vmatmul.mubr.bf16.gmra.mrb[0].mxu0 %v871
        %v1027 = vpop.f32.mrb[0].mxu0
        %v1028 = vadd.f32 %v903, %v1027
        %v1029 = vpop.f32.mrb[0].mxu0
        %v1030 = vpop.f32.mrb[0].mxu0
        %v1031 = vadd.f32 %v903, %v1030
        %v1032 = vpop.f32.mrb[0].mxu0
        %1033 = vmatprep.mubr.bf16.mxu0 0
        %1034 = vmatmul.mubr.bf16.gmra.mrb[0].mxu0 %v872
        %v1035 = vpop.f32.mrb[0].mxu0
        %v1036 = vadd.f32 %v903, %v1035
        %v1037 = vpop.f32.mrb[0].mxu0
        %v1038 = vpop.f32.mrb[0].mxu0
        %v1039 = vadd.f32 %v903, %v1038
        %v1040 = vpop.f32.mrb[0].mxu0
        %1041 = vmatprep.mubr.bf16.mxu0 0
        %1042 = vmatmul.mubr.bf16.gmra.mrb[0].mxu0 %v873
        %v1043 = vpop.f32.mrb[0].mxu0
        %v1044 = vadd.f32 %v903, %v1043
        %v1045 = vpop.f32.mrb[0].mxu0
        %v1046 = vpop.f32.mrb[0].mxu0
        %v1047 = vadd.f32 %v903, %v1046
        %v1048 = vpop.f32.mrb[0].mxu0
        %1049 = vmatprep.mubr.bf16.mxu0 0
        %1050 = vmatmul.mubr.bf16.gmra.mrb[0].mxu0 %v874
        %v1051 = vpop.f32.mrb[0].mxu0
        %v1052 = vadd.f32 %v903, %v1051
        %v1053 = vpop.f32.mrb[0].mxu0
        %v1054 = vpop.f32.mrb[0].mxu0
        %v1055 = vadd.f32 %v903, %v1054
        %v1056 = vpop.f32.mrb[0].mxu0
        %1057 = vmatprep.mubr.bf16.mxu0 0
        %1058 = vmatmul.mubr.bf16.gmra.mrb[0].mxu0 %v875
        %v1059 = vpop.f32.mrb[0].mxu0
        %v1060 = vadd.f32 %v903, %v1059
        %v1061 = vpop.f32.mrb[0].mxu0
        %v1062 = vpop.f32.mrb[0].mxu0
        %v1063 = vadd.f32 %v903, %v1062
        %v1064 = vpop.f32.mrb[0].mxu0
        %1065 = vmatprep.mubr.bf16.mxu0 0
        %1066 = vmatmul.mubr.bf16.gmra.mrb[0].mxu0 %v876
        %v1067 = vpop.f32.mrb[0].mxu0
        %v1068 = vadd.f32 %v903, %v1067
        %v1069 = vpop.f32.mrb[0].mxu0
        %v1070 = vpop.f32.mrb[0].mxu0
        %v1071 = vadd.f32 %v903, %v1070
        %v1072 = vpop.f32.mrb[0].mxu0
        %1073 = vmatprep.mubr.bf16.mxu0 0
        %1074 = vmatmul.mubr.bf16.gmra.mrb[0].mxu0 %v877
        %v1075 = vpop.f32.mrb[0].mxu0
        %v1076 = vadd.f32 %v903, %v1075
        %v1077 = vpop.f32.mrb[0].mxu0
        %v1078 = vpop.f32.mrb[0].mxu0
        %v1079 = vadd.f32 %v903, %v1078
        %v1080 = vpop.f32.mrb[0].mxu0
        %1081 = vmatprep.mubr.bf16.mxu0 0
        %1082 = vmatmul.mubr.bf16.gmra.mrb[0].mxu0 %v878
        %v1083 = vpop.f32.mrb[0].mxu0
        %v1084 = vadd.f32 %v903, %v1083
        %v1085 = vpop.f32.mrb[0].mxu0
        %v1086 = vpop.f32.mrb[0].mxu0
        %v1087 = vadd.f32 %v903, %v1086
        %v1088 = vpop.f32.mrb[0].mxu0
        %1089 = vmatprep.mubr.bf16.mxu0 0
        %1090 = vmatmul.mubr.bf16.gmra.mrb[0].mxu0 %v879
        %v1091 = vpop.f32.mrb[0].mxu0
        %v1092 = vadd.f32 %v903, %v1091
        %v1093 = vpop.f32.mrb[0].mxu0
        %v1094 = vpop.f32.mrb[0].mxu0
        %v1095 = vadd.f32 %v903, %v1094
        %v1096 = vpop.f32.mrb[0].mxu0
        %1097 = vmatprep.mubr.bf16.mxu0 0
        %1098 = vmatmul.mubr.bf16.gmra.mrb[0].mxu0 %v880
        %v1099 = vpop.f32.mrb[0].mxu0
        %v1100 = vadd.f32 %v903, %v1099
        %v1101 = vpop.f32.mrb[0].mxu0
        %v1102 = vpop.f32.mrb[0].mxu0
        %v1103 = vadd.f32 %v903, %v1102
        %v1104 = vpop.f32.mrb[0].mxu0
        %1105 = vmatprep.mubr.bf16.mxu0 0
        %1106 = vmatmul.mubr.bf16.gmra.mrb[0].mxu0 %v881
        %v1107 = vpop.f32.mrb[0].mxu0
        %v1108 = vadd.f32 %v903, %v1107
        %v1109 = vpop.f32.mrb[0].mxu0
        %v1110 = vpop.f32.mrb[0].mxu0
        %v1111 = vadd.f32 %v903, %v1110
        %v1112 = vpop.f32.mrb[0].mxu0
        %1113 = vdwg.mxu0
        %1114 = vst [vmem:[%s272] sm:$0xff] %v988
        %1115 = vst [vmem:[%s272 + $0x8] sm:$0xff] %v991
        %1116 = vst [vmem:[%s272 + $0x10] sm:$0xff] %v996
        %1117 = vst [vmem:[%s272 + $0x18] sm:$0xff] %v999
        %1118 = vst [vmem:[%s272 + $0x20] sm:$0xff] %v1004
        %1119 = vst [vmem:[%s272 + $0x28] sm:$0xff] %v1007
        %1120 = vst [vmem:[%s272 + $0x30] sm:$0xff] %v1012
        %1121 = vst [vmem:[%s272 + $0x38] sm:$0xff] %v1015
        %1122 = vst [vmem:[%s272 + $0x40] sm:$0xff] %v1020
        %1123 = vst [vmem:[%s272 + $0x48] sm:$0xff] %v1023
        %1124 = vst [vmem:[%s272 + $0x50] sm:$0xff] %v1028
        %1125 = vst [vmem:[%s272 + $0x58] sm:$0xff] %v1031
        %1126 = vst [vmem:[%s272 + $0x60] sm:$0xff] %v1036
        %1127 = vst [vmem:[%s272 + $0x68] sm:$0xff] %v1039
        %1128 = vst [vmem:[%s272 + $0x70] sm:$0xff] %v1044
        %1129 = vst [vmem:[%s272 + $0x78] sm:$0xff] %v1047
        %1130 = vst [vmem:[%s272 + $0x80] sm:$0xff] %v1052
        %1131 = vst [vmem:[%s272 + $0x88] sm:$0xff] %v1055
        %1132 = vst [vmem:[%s272 + $0x90] sm:$0xff] %v1060
        %1133 = vst [vmem:[%s272 + $0x98] sm:$0xff] %v1063
        %1134 = vst [vmem:[%s272 + $0xa0] sm:$0xff] %v1068
        %1135 = vst [vmem:[%s272 + $0xa8] sm:$0xff] %v1071
        %1136 = vst [vmem:[%s272 + $0xb0] sm:$0xff] %v1076
        %1137 = vst [vmem:[%s272 + $0xb8] sm:$0xff] %v1079
        %1138 = vst [vmem:[%s272 + $0xc0] sm:$0xff] %v1084
        %1139 = vst [vmem:[%s272 + $0xc8] sm:$0xff] %v1087
        %1140 = vst [vmem:[%s272 + $0xd0] sm:$0xff] %v1092
        %1141 = vst [vmem:[%s272 + $0xd8] sm:$0xff] %v1095
        %1142 = vst [vmem:[%s272 + $0xe0] sm:$0xff] %v1100
        %1143 = vst [vmem:[%s272 + $0xe8] sm:$0xff] %v1103
        %1144 = vst [vmem:[%s272 + $0xf0] sm:$0xff] %v1108
        %1145 = vst [vmem:[%s272 + $0xf8] sm:$0xff] %v1111
        %s1146 = sand.u32 %s181, 1
        %s1147 = scalar_lea.sflag [#allocation3], %s1146
        %s1148 = sand.u32 %s181, 1
        %s1149 = smul.addr %s1148, 256
        %s1150 = scalar_lea.vmem [#allocation2], %s1149
        // Predicated region
        $region49: #{tpu_custom_call.1} parent=47 // pred_check
          %p1151 = pneg %p191
        $region50: #{tpu_custom_call.1} parent=47 // pred_check_branch
          %1153 = sbr.rel (%p1151) target = $region52
        $region51: #{tpu_custom_call.1} parent=47 // pred_region
          %s1154 = smul.u32 32, %s21
          %s1156 = ssub.s32 4096, 4096
          %1157 = vsyncadd %s1147, %s1156
          %s1158 = smul.addr %s1154, 128
          %s1159 = scalar_lea.hbm %s7, %s1158
          %s1160 = sshll.u32 %s1150, 4
          %s1161 = int_to_ptr.vmem [resolvable:$true] %s1160
          %1166 = dma.vmem_to_hbm [thread:$0]  %s1161, 4096, %s1159, %s1147, 128, 128, 8
        $region52: #{tpu_custom_call.1} parent=47 // pred_fallthru
          _
      $region48: #{tpu_custom_call.1} parent=5 // pred_fallthru
        _
      %p1167 = scmp.le.s32.totalorder 2, %s16
      // Predicated region
      $region53: #{tpu_custom_call.1} parent=5 // pred_check
        %p1168 = pneg %p1167
      $region54: #{tpu_custom_call.1} parent=5 // pred_check_branch
        %1170 = sbr.rel (%p1168) target = $region56
      $region55: #{tpu_custom_call.1} parent=5 // pred_region
        %s1171 = ssub.s32 %s16, 2
        // Predicated region
        $region57: #{tpu_custom_call.1} parent=55 // pred_check
          %p1172 = pneg %p197
        $region58: #{tpu_custom_call.1} parent=55 // pred_check_branch
          %1174 = sbr.rel (%p1172) target = $region60
        $region59: #{tpu_custom_call.1} parent=55 // pred_region
          %s1175 = sand.u32 %s182, 1
          %s1176 = scalar_lea.sflag [#allocation3], %s1175
          %s1177 = sand.u32 %s182, 1
          %s1178 = smul.addr %s1177, 256
          %s1179 = scalar_lea.vmem [#allocation2], %s1178
          %1180 = dma.done %s1176, 4096
        $region60: #{tpu_custom_call.1} parent=55 // pred_fallthru
          _
      $region56: #{tpu_custom_call.1} parent=5 // pred_fallthru
        _
    $region6: #{tpu_custom_call.1} parent=1 // loop_footer
      %s20 = sadd.s32 1, %s16
    $region7: #{tpu_custom_call.1} parent=1 // loop_footer_branch
      %15 = sbr.rel target = $region3
    $region8: #{tpu_custom_call.1} parent=1 // loop_exit
      _
    %1181 = vsyncpa [#allocation3], 1
    %s1182 = scalar_lea.sflag [#allocation3], 1
    %1183 = vsyncpa %s1182, 1

</llo_original>
